<compile_context>
chip_gen: v5e
topology: v5e:2x2
jax: 0.10.0
libtpu: 0.0.40
codegen_flags: <defaults>
</compile_context>

<pallas_src>
import functools

import jax
import jax.numpy as jnp
from jax.experimental import pallas as pl
from jax.experimental.pallas import tpu as pltpu


def _cdiv(a: int, b: int) -> int:
    return -(-a // b)


def _round_up(a: int, m: int) -> int:
    return _cdiv(a, m) * m


def _pos_encoding_table(hidden_dim: int, max_seq_len: int) -> jnp.ndarray:
    """Vectorized replica of the torch __init__ double loop.

    The torch loop writes column i with exponent 2*i/H and column i+1 with
    exponent 2*(i+1)/H, i.e. exponent 2*j/H for every column j; sin on even
    columns, cos on odd columns.
    """
    pos = jnp.arange(max_seq_len, dtype=jnp.float32)[:, None]      # (L, 1)
    j = jnp.arange(hidden_dim, dtype=jnp.float32)[None, :]         # (1, H)
    angle = pos / jnp.power(10000.0, 2.0 * j / hidden_dim)         # (L, H)
    even = (jnp.arange(hidden_dim) % 2 == 0)[None, :]
    return jnp.where(even, jnp.sin(angle), jnp.cos(angle)).astype(jnp.float32)


def _pe_kernel(x_ref, pew_ref, o_ref, *, batch: int, group: int, hidden: int):
    """x_ref / o_ref: (ts, group*batch*hidden) lane-dense tiles.

    pew_ref: (ts, group*2*hidden) -- for each folded row, `group` consecutive
    sequence rows of [pe | pos_embed_weight] concatenated along lanes.
    """
    two_h = 2 * hidden
    for q in range(group):                         # static unroll (group <= 128)
        base = q * two_h
        pe_q = pew_ref[:, base:base + hidden].astype(jnp.float32)
        w_q = pew_ref[:, base + hidden:base + two_h].astype(jnp.float32)
        pe_use = pe_q * jax.nn.sigmoid(w_q)        # (ts, H): EUP + VPU
        for b in range(batch):
            lo = (q * batch + b) * hidden
            o_ref[:, lo:lo + hidden] = (
                x_ref[:, lo:lo + hidden].astype(jnp.float32) + pe_use
            ).astype(o_ref.dtype)


def _choose_seq_tile(s_rows: int, lanes: int, pew_lanes: int, group: int,
                     hidden: int, x_bytes: int,
                     *, target_tile_bytes: int = 2 << 20,
                     budget_bytes: int = 24 << 20) -> int:
    """Byte-targeted, VMEM-budgeted, megacore-balanced seq tile (folded rows)."""
    # In-flight VMEM per folded row: double-buffered x in + out tiles,
    # double-buffered [pe|w] window, plus the (ts, H) pe_use / add temporaries
    # the kernel materializes (f32).
    per_row = (2 * lanes + 2 * lanes) * x_bytes
    per_row += 2 * pew_lanes * 4
    per_row += (group + 1) * hidden * 4
    ts_budget = max(8, budget_bytes // per_row)
    ts_target = max(8, _cdiv(target_tile_bytes, lanes * x_bytes))
    ts = min(ts_target, ts_budget)
    ts = max(8, (ts // 8) * 8)
    if ts >= s_rows:
        return s_rows                                # single block
    # Round the step count up to an even number of near-equal tiles so v7x's
    # two TensorCores split the "parallel" axis evenly (harmless on v5e/v6e).
    steps = _cdiv(s_rows, ts)
    steps += steps % 2
    ts_bal = min(ts, _round_up(_cdiv(s_rows, steps), 8))
    return max(8, ts_bal)


def positional_encoder_forward(x, pe_full, pos_embed_weight_full, *, seq_tile=None):
    """x: (seq, batch, hidden); pe_full / pos_embed_weight_full: (1, max_seq_len, hidden).

    `seq_tile` (optional, mainly for tests) is a tile size in *folded* rows,
    i.e. rows of the lane-dense 2D view of x.
    """
    S, B, H = x.shape
    L = pe_full.shape[1]
    assert S <= L, "sequence longer than the positional-encoding table"
    BH = B * H

    # --- Lane folding: when B*H < 128, fold g sequence rows into the lane dim
    # so DMA rows / output stores use all 128 lanes.
    g = 1
    if BH < 128 and 128 % BH == 0:
        cand = 128 // BH
        if S % cand == 0:
            g = cand
    s_rows = S // g
    lanes = g * BH
    x2d = x.reshape(s_rows, lanes)                    # contiguous reshape (free)

    # --- One stacked [pe | w] table, folded like x -> one wide DMA window per
    # grid step; the kernel only uses static lane slices of it.
    pew = jnp.concatenate(
        [pe_full[0].astype(jnp.float32),
         pos_embed_weight_full[0].astype(jnp.float32)], axis=-1)   # (L, 2H)
    Lp = _round_up(L, g)
    if Lp != L:
        pew = jnp.pad(pew, ((0, Lp - L), (0, 0)))
    pew_lanes = g * 2 * H
    pew_fold = pew.reshape(Lp // g, pew_lanes)

    # --- Seq tile selection / validation.
    if seq_tile is None:
        ts = _choose_seq_tile(s_rows, lanes, pew_lanes, g, H,
                              jnp.dtype(x.dtype).itemsize)
    else:
        ts = min(max(int(seq_tile), 1), s_rows)
        if ts < s_rows:                               # multi-block -> (8,128)-safe
            ts = max(8, (ts // 8) * 8) if s_rows >= 8 else s_rows

    grid = (pl.cdiv(s_rows, ts),)

    # (8,128) rule: a multi-block ts is always a multiple of 8.  A ts that is
    # not a multiple of 8 covers the whole (tiny) input; slice the table once
    # so its block shape equals its full dims.
    if ts % 8 != 0:
        pew_fold = pew_fold[:s_rows]

    out2d = pl.pallas_call(
        functools.partial(_pe_kernel, batch=B, group=g, hidden=H),
        out_shape=jax.ShapeDtypeStruct((s_rows, lanes), x.dtype),
        grid_spec=pltpu.PrefetchScalarGridSpec(
            num_scalar_prefetch=0,
            grid=grid,
            in_specs=[
                pl.BlockSpec((ts, lanes), lambda s: (s, 0)),        # x (lane-dense)
                pl.BlockSpec((ts, pew_lanes), lambda s: (s, 0)),    # [pe|w] window
            ],
            out_specs=pl.BlockSpec((ts, lanes), lambda s: (s, 0)),
        ),
        compiler_params=pltpu.CompilerParams(
            dimension_semantics=("parallel",),        # megacore split on v7x
            vmem_limit_bytes=48 * 1024 * 1024,        # safe on v7x's 64 MiB/TC
        ),
    )(x2d, pew_fold)

    return out2d.reshape(S, B, H)


def _reference(x, pe_full, w_full):
    S = x.shape[0]
    pe_use = pe_full[0, :S] * jax.nn.sigmoid(w_full[0, :S])
    return x + pe_use[:, None, :]


if __name__ == "__main__":
    hidden_dim = 32
    max_seq_len = 300
    batch = 2

    # Deterministic parameter init matching the module's __init__:
    pe_buffer = _pos_encoding_table(hidden_dim, max_seq_len)[None]            # (1, L, H)
    pos_embed_weight = jnp.ones((1, max_seq_len, hidden_dim), jnp.float32)    # torch.ones_like(pe)

    key = jax.random.PRNGKey(0)
    k1, k2, k3 = jax.random.split(key, 3)

    # Test 1: the module's small demo shape -> lane-folded (g=2), single 128-lane block.
    x1 = jax.random.normal(k1, (8, batch, hidden_dim), dtype=jnp.float32)
    out1 = jax.block_until_ready(
        positional_encoder_forward(x1, pe_buffer, pos_embed_weight))
    assert out1.shape == x1.shape
    assert jnp.allclose(out1, _reference(x1, pe_buffer, pos_embed_weight),
                        atol=1e-6), "mismatch vs reference (test 1)"

    # Test 2: multi-block pipelined grid with a clipped final tile
    # (S=40 -> 20 folded rows, ts=8 -> tiles of 8, 8, 4).
    x2 = jax.random.normal(k2, (40, batch, hidden_dim), dtype=jnp.float32)
    out2 = jax.block_until_ready(
        positional_encoder_forward(x2, pe_buffer, pos_embed_weight, seq_tile=8))
    assert out2.shape == x2.shape
    assert jnp.allclose(out2, _reference(x2, pe_buffer, pos_embed_weight),
                        atol=1e-6), "mismatch vs reference (test 2)"

    # Test 3: odd sequence length -> no lane folding, tiny single-block fallback.
    x3 = jax.random.normal(k3, (7, batch, hidden_dim), dtype=jnp.float32)
    out3 = jax.block_until_ready(
        positional_encoder_forward(x3, pe_buffer, pos_embed_weight))
    assert out3.shape == x3.shape
    assert jnp.allclose(out3, _reference(x3, pe_buffer, pos_embed_weight),
                        atol=1e-6), "mismatch vs reference (test 3)"

    print("KERNEL_OK")
</pallas_src>

<mosaic_0001>
module attributes {stable_mosaic.version = 11 : i64} {
  func.func @_pe_kernel(%arg0: i32, %arg1: memref<4x128xf32, #tpu.memory_space<vmem>>, %arg2: memref<4x128xf32, #tpu.memory_space<vmem>>, %arg3: memref<4x128xf32, #tpu.memory_space<vmem>>) attributes {dimension_semantics = [#tpu.dimension_semantics<parallel>], iteration_bounds = array<i64: 1>, scalar_prefetch = 0 : i64, scratch_operands = 0 : i64, tpu.core_type = #tpu.core_type<tc>, window_params = [{transform_indices = @transform_0, window_bounds = array<i64: 4, 128>}, {transform_indices = @transform_1, window_bounds = array<i64: 4, 128>}, {transform_indices = @transform_2, window_bounds = array<i64: 4, 128>}]} {
    %c0 = arith.constant 0 : index
    %c0_0 = arith.constant 0 : index
    %0 = vector.load %arg2[%c0, %c0_0] : memref<4x128xf32, #tpu.memory_space<vmem>>, vector<4x32xf32>
    %c0_1 = arith.constant 0 : index
    %c32 = arith.constant 32 : index
    %1 = vector.load %arg2[%c0_1, %c32] : memref<4x128xf32, #tpu.memory_space<vmem>>, vector<4x32xf32>
    %2 = arith.negf %1 : vector<4x32xf32>
    %3 = math.exp %2 : vector<4x32xf32>
    %cst = arith.constant 1.000000e+00 : f32
    %4 = vector.broadcast %cst : f32 to vector<4x32xf32>
    %5 = arith.addf %4, %3 : vector<4x32xf32>
    %6 = arith.divf %4, %5 : vector<4x32xf32>
    %7 = arith.mulf %0, %6 : vector<4x32xf32>
    %c0_2 = arith.constant 0 : index
    %c0_3 = arith.constant 0 : index
    %8 = vector.load %arg1[%c0_2, %c0_3] : memref<4x128xf32, #tpu.memory_space<vmem>>, vector<4x32xf32>
    %9 = arith.addf %8, %7 : vector<4x32xf32>
    %c0_4 = arith.constant 0 : index
    %c0_5 = arith.constant 0 : index
    %10 = vector.load %arg3[%c0_4, %c0_5] : memref<4x128xf32, #tpu.memory_space<vmem>>, vector<4x32xf32>
    tpu.vector_store %arg3[%c0_4, %c0_5], %9 {strides = array<i32>} : memref<4x128xf32, #tpu.memory_space<vmem>>, vector<4x32xf32>,
    %c0_6 = arith.constant 0 : index
    %c32_7 = arith.constant 32 : index
    %11 = vector.load %arg1[%c0_6, %c32_7] : memref<4x128xf32, #tpu.memory_space<vmem>>, vector<4x32xf32>
    %12 = arith.addf %11, %7 : vector<4x32xf32>
    %c0_8 = arith.constant 0 : index
    %c32_9 = arith.constant 32 : index
    %13 = vector.load %arg3[%c0_8, %c32_9] : memref<4x128xf32, #tpu.memory_space<vmem>>, vector<4x32xf32>
    tpu.vector_store %arg3[%c0_8, %c32_9], %12 {strides = array<i32>} : memref<4x128xf32, #tpu.memory_space<vmem>>, vector<4x32xf32>,
    %c0_10 = arith.constant 0 : index
    %c64 = arith.constant 64 : index
    %14 = vector.load %arg2[%c0_10, %c64] : memref<4x128xf32, #tpu.memory_space<vmem>>, vector<4x32xf32>
    %c0_11 = arith.constant 0 : index
    %c96 = arith.constant 96 : index
    %15 = vector.load %arg2[%c0_11, %c96] : memref<4x128xf32, #tpu.memory_space<vmem>>, vector<4x32xf32>
    %16 = arith.negf %15 : vector<4x32xf32>
    %17 = math.exp %16 : vector<4x32xf32>
    %cst_12 = arith.constant 1.000000e+00 : f32
    %18 = vector.broadcast %cst_12 : f32 to vector<4x32xf32>
    %19 = arith.addf %18, %17 : vector<4x32xf32>
    %20 = arith.divf %18, %19 : vector<4x32xf32>
    %21 = arith.mulf %14, %20 : vector<4x32xf32>
    %c0_13 = arith.constant 0 : index
    %c64_14 = arith.constant 64 : index
    %22 = vector.load %arg1[%c0_13, %c64_14] : memref<4x128xf32, #tpu.memory_space<vmem>>, vector<4x32xf32>
    %23 = arith.addf %22, %21 : vector<4x32xf32>
    %c0_15 = arith.constant 0 : index
    %c64_16 = arith.constant 64 : index
    %24 = vector.load %arg3[%c0_15, %c64_16] : memref<4x128xf32, #tpu.memory_space<vmem>>, vector<4x32xf32>
    tpu.vector_store %arg3[%c0_15, %c64_16], %23 {strides = array<i32>} : memref<4x128xf32, #tpu.memory_space<vmem>>, vector<4x32xf32>,
    %c0_17 = arith.constant 0 : index
    %c96_18 = arith.constant 96 : index
    %25 = vector.load %arg1[%c0_17, %c96_18] : memref<4x128xf32, #tpu.memory_space<vmem>>, vector<4x32xf32>
    %26 = arith.addf %25, %21 : vector<4x32xf32>
    %c0_19 = arith.constant 0 : index
    %c96_20 = arith.constant 96 : index
    %27 = vector.load %arg3[%c0_19, %c96_20] : memref<4x128xf32, #tpu.memory_space<vmem>>, vector<4x32xf32>
    tpu.vector_store %arg3[%c0_19, %c96_20], %26 {strides = array<i32>} : memref<4x128xf32, #tpu.memory_space<vmem>>, vector<4x32xf32>,
    return
  }
  func.func @transform_0(%arg0: i32) -> (i32, i32) {
    %c0_i32 = arith.constant 0 : i32
    %c0_i32_0 = arith.constant 0 : i32
    return %arg0, %c0_i32 : i32, i32
  }
  func.func @transform_1(%arg0: i32) -> (i32, i32) {
    %c0_i32 = arith.constant 0 : i32
    %c0_i32_0 = arith.constant 0 : i32
    return %arg0, %c0_i32 : i32, i32
  }
  func.func @transform_2(%arg0: i32) -> (i32, i32) {
    %c0_i32 = arith.constant 0 : i32
    %c0_i32_0 = arith.constant 0 : i32
    return %arg0, %c0_i32 : i32, i32
  }
}

</mosaic_0001>

<llo_original>
// kernel: tpu_custom_call.1
$region0: #{tpu_custom_call.1}
  #allocation0 [shape = 'u32[]', space=smem, size = 0x4, offset = 0x4, fixed_abs, tag = 'smem constant byte address 0x4 - core index']
  #allocation1 [shape = 'u32[72,128]{1,0:T(1,128)}', space=vmem, size = 0x9000, scoped, tag = 'internal scratch']
  %s0 = inlined_call_operand.hbm [shape: f32[4,128], index: 0, kind: input, shape index: {}]
  %s1 = inlined_call_operand.hbm [shape: f32[4,128], index: 1, kind: input, shape index: {}]
  %s2 = inlined_call_operand.hbm [shape: f32[4,128], index: 2, kind: output, shape index: {}]
  %s3 = sld [smem:[#allocation0]]
  $region26: #{tpu_custom_call.1} parent=0
    _
  %s5 = ssub.s32 1, %s3
  %s6 = scalar_select 0, %s5, %s3
  $region1: #{tpu_custom_call.1} parent=0
    #allocation2 [shape = 'u8[2048]{0}', space=vmem, size = 0x800, scoped, tag = 'input window, operand 0, single buffered']
    #allocation3 [shape = 's32[1]{0}', space=sflag, size = 0x4, scoped, tag = 'scoped memory for tpu_custom_call.1']
    #allocation4 [shape = 's32[1]{0}', space=sflag, size = 0x4, scoped, tag = 'scoped memory for tpu_custom_call.1']
    #allocation5 [shape = 'u8[2048]{0}', space=vmem, size = 0x800, scoped, tag = 'input window, operand 1, single buffered']
    #allocation6 [shape = 's32[1]{0}', space=sflag, size = 0x4, scoped, tag = 'scoped memory for tpu_custom_call.1']
    #allocation7 [shape = 'u8[2048]{0}', space=vmem, size = 0x800, scoped, tag = 'output window, operand 0, single buffered']
    %7 = vsyncpa [#allocation3], 0
    %8 = vsyncpa [#allocation6], 0
    %9 = vsyncpa [#allocation4], 0
    // Predicated region
    $region2: #{tpu_custom_call.1} parent=1 // pred_check
      _
    $region3: #{tpu_custom_call.1} parent=1 // pred_check_branch
      %11 = sbr.rel (0) target = $region5
    $region4: #{tpu_custom_call.1} parent=1 // pred_region
      %13 = vsyncadd [#allocation3], 0
      %s15 = sshll.u32 %s0, 4
      %s16 = int_to_ptr.hbm [resolvable:$true] %s15
      %s17 = sshll.u32 [#allocation2], 4
      %s18 = int_to_ptr.vmem [resolvable:$true] %s17
      %20 = dma.hbm_to_vmem [thread:$0]  %s16, 64, %s18, [#allocation3]
    $region5: #{tpu_custom_call.1} parent=1 // pred_fallthru
      _
    // Predicated region
    $region6: #{tpu_custom_call.1} parent=1 // pred_check
      _
    $region7: #{tpu_custom_call.1} parent=1 // pred_check_branch
      %22 = sbr.rel (0) target = $region9
    $region8: #{tpu_custom_call.1} parent=1 // pred_region
      %24 = vsyncadd [#allocation6], 0
      %s26 = sshll.u32 %s1, 4
      %s27 = int_to_ptr.hbm [resolvable:$true] %s26
      %s28 = sshll.u32 [#allocation5], 4
      %s29 = int_to_ptr.vmem [resolvable:$true] %s28
      %31 = dma.hbm_to_vmem [thread:$0]  %s27, 64, %s29, [#allocation6]
    $region9: #{tpu_custom_call.1} parent=1 // pred_fallthru
      _
    // Predicated region
    $region10: #{tpu_custom_call.1} parent=1 // pred_check
      _
    $region11: #{tpu_custom_call.1} parent=1 // pred_check_branch
      %33 = sbr.rel (0) target = $region13
    $region12: #{tpu_custom_call.1} parent=1 // pred_region
      %35 = dma.done [#allocation3], 64
    $region13: #{tpu_custom_call.1} parent=1 // pred_fallthru
      _
    // Predicated region
    $region14: #{tpu_custom_call.1} parent=1 // pred_check
      _
    $region15: #{tpu_custom_call.1} parent=1 // pred_check_branch
      %37 = sbr.rel (0) target = $region17
    $region16: #{tpu_custom_call.1} parent=1 // pred_region
      %39 = dma.done [#allocation6], 64
    $region17: #{tpu_custom_call.1} parent=1 // pred_fallthru
      _
    %v40 = vld [vmem:[#allocation5] sm:$0xf]
    %v41 = vxor.u32 %v40, 2147483648
    %v42 = vmul.f32 %v41, 1.442695
    %v43 = vpow.pop %v42
    %v44 = vadd.f32 %v43, 1.0
    %v45 = vrcp.pop %v44
    %v46 = vmul.f32 %v44, %v45
    %v47 = vsub.f32 1.0, %v46
    %v48 = vmul.f32 %v45, %v47
    %v49 = vadd.f32 %v45, %v48
    %vm50 = vweird.f32 %v44
    %vm51 = vweird.f32 %v45
    %vm52 = vmor %vm50, %vm51
    %v53 = vsel %vm52, %v45, %v49
    %v54 = vand.u32 2147483647, %v44
    %vm55 = vcmp.eq.f32.partialorder %v54, 8.507059e+37
    %v56 = vand.u32 %v44, 2147483648
    %v57 = vor.u32 1.1754944e-38, %v56
    %v58 = vsel %vm55, %v57, %v53
    %v59 = vmul.f32 1.0, %v58
    %61 = vrot.lane.b32.xlu0 %v59, 96
    %v62 = vpop.permute.xlu0 %61
    %v64 = vmul.f32 %v40, %v62
    %v65 = vld [vmem:[#allocation2] sm:$0xf]
    %v66 = vadd.f32 %v65, %v64
    %vm67 = vcmask 257024
    %68 = vst.msk [vmem:[#allocation7] sm:$0xf] %vm67, %v66
    %v69 = vld [vmem:[#allocation2] sm:$0xf]
    %71 = vrot.lane.b32.xlu0 %v64, 32
    %v72 = vpop.permute.xlu0 %71
    %v74 = vadd.f32 %v69, %v72
    %vm75 = vcmask 519424
    %76 = vst.msk [vmem:[#allocation7] sm:$0xf] %vm75, %v74
    %v77 = vld [vmem:[#allocation5] sm:$0xf]
    %v78 = vxor.u32 %v77, 2147483648
    %v79 = vmul.f32 %v78, 1.442695
    %v80 = vpow.pop %v79
    %v81 = vadd.f32 %v80, 1.0
    %v82 = vrcp.pop %v81
    %v83 = vmul.f32 %v81, %v82
    %v84 = vsub.f32 1.0, %v83
    %v85 = vmul.f32 %v82, %v84
    %v86 = vadd.f32 %v82, %v85
    %vm87 = vweird.f32 %v81
    %vm88 = vweird.f32 %v82
    %vm89 = vmor %vm87, %vm88
    %v90 = vsel %vm89, %v82, %v86
    %v91 = vand.u32 2147483647, %v81
    %vm92 = vcmp.eq.f32.partialorder %v91, 8.507059e+37
    %v93 = vand.u32 %v81, 2147483648
    %v94 = vor.u32 1.1754944e-38, %v93
    %v95 = vsel %vm92, %v94, %v90
    %v96 = vmul.f32 1.0, %v95
    %98 = vrot.lane.b32.xlu0 %v96, 96
    %v99 = vpop.permute.xlu0 %98
    %v101 = vmul.f32 %v77, %v99
    %v102 = vld [vmem:[#allocation2] sm:$0xf]
    %v103 = vadd.f32 %v102, %v101
    %vm104 = vcmask 781824
    %105 = vst.msk [vmem:[#allocation7] sm:$0xf] %vm104, %v103
    %v106 = vld [vmem:[#allocation2] sm:$0xf]
    %108 = vrot.lane.b32.xlu0 %v101, 32
    %v109 = vpop.permute.xlu0 %108
    %v111 = vadd.f32 %v106, %v109
    %vm112 = vcmask 1044224
    %113 = vst.msk [vmem:[#allocation7] sm:$0xf] %vm112, %v111
    // Predicated region
    $region18: #{tpu_custom_call.1} parent=1 // pred_check
      _
    $region19: #{tpu_custom_call.1} parent=1 // pred_check_branch
      %115 = sbr.rel (0) target = $region21
    $region20: #{tpu_custom_call.1} parent=1 // pred_region
      %117 = vsyncadd [#allocation4], 0
      %s119 = sshll.u32 [#allocation7], 4
      %s120 = int_to_ptr.vmem [resolvable:$true] %s119
      %s121 = sshll.u32 %s2, 4
      %s122 = int_to_ptr.hbm [resolvable:$true] %s121
      %124 = dma.vmem_to_hbm [thread:$0]  %s120, 64, %s122, [#allocation4]
    $region21: #{tpu_custom_call.1} parent=1 // pred_fallthru
      _
    // Predicated region
    $region22: #{tpu_custom_call.1} parent=1 // pred_check
      _
    $region23: #{tpu_custom_call.1} parent=1 // pred_check_branch
      %126 = sbr.rel (0) target = $region25
    $region24: #{tpu_custom_call.1} parent=1 // pred_region
      %128 = dma.done [#allocation4], 64
    $region25: #{tpu_custom_call.1} parent=1 // pred_fallthru
      _
    %129 = vsyncpa [#allocation3], 1
    %130 = vsyncpa [#allocation6], 1
    %131 = vsyncpa [#allocation4], 1

</llo_original>
